<compile_context>
chip_gen: v7x
topology: tpu7x:2x2x1
jax: 0.10.0
libtpu: 0.0.40
codegen_flags: <defaults>
</compile_context>

<pallas_src>
import functools

import jax
import jax.numpy as jnp
from jax.experimental import pallas as pl
from jax.experimental.pallas import tpu as pltpu

_MIB = 1024 * 1024


def _round_up(v, m):
    return (v + m - 1) // m * m


def _vmem_capacity_bytes():
    """Per-core VMEM capacity (generation-aware), conservative fallback."""
    try:
        cap = int(pltpu.get_tpu_info().vmem_capacity_bytes)
        if cap >= 16 * _MIB:
            return cap
    except Exception:
        pass
    return 64 * _MIB  # conservative: v7x per-core VMEM


def _choose_tile_m(m_rows, d1, d2, itemsize, budget):
    """Rows per grid step.

    Multiple of 200 = lcm(8, 25) so every block starts at BN channel 0 (one
    resident (tile_m, 2) scale/shift block serves all steps); single ragged
    block for tiny batches.  Caps the tile so the double-buffered working set
    (resident W counted twice!) fits `budget` and so that the grid has >=4
    steps when the batch allows it (v7x megacore + pipeline overlap).
    """
    if m_rows <= 200:
        return _round_up(m_rows, 8)          # single grid step
    d1p = _round_up(d1, 128)                 # VMEM lane padding
    d2p = _round_up(d2, 128)
    resident = 2 * (_round_up(d1, 8) * d2p + 8 * d2p) * itemsize  # W + bias, double-buffered
    per_row = (2 * d1p * itemsize            # x tile in, double-buffered
               + 2 * d2p * itemsize          # y tile out, double-buffered (pass 2)
               + d2p * 4                     # in-register / spilled f32 h intermediate
               + 4 * 128 * 4)                # packed stats out + resident scale/shift rows
    avail = max(budget - resident, per_row * 200)
    tile = max(200, (avail // per_row) // 200 * 200)
    # >= 4 grid steps when possible (round the cap DOWN to a multiple of 200).
    cap4 = max(200, (pl.cdiv(m_rows, 4) // 200) * 200)
    return min(tile, cap4, 200 * 64)


def _stats_kernel(x_ref, w_ref, b_ref, stats_ref):
    """Linear (recomputed later) -> per-row BN partial stats. No h writeback."""
    h = jnp.dot(x_ref[...], w_ref[...], preferred_element_type=jnp.float32)
    h = h + b_ref[...].astype(jnp.float32)
    # Pack sum / sum-of-squares into one (tile_m, 2) block: a single small
    # store+DMA per step (keeping it 2 lanes instead of a "lane-dense" 128
    # avoids multiplying the stats HBM traffic by 64x).
    stats_ref[:, 0:1] = jnp.sum(h, axis=1, keepdims=True)
    stats_ref[:, 1:2] = jnp.sum(h * h, axis=1, keepdims=True)


def _fc_bn_relu_kernel(x_ref, w_ref, b_ref, ss_ref, o_ref):
    """Fused Linear + BN per-channel affine + ReLU (matmul recomputed here)."""
    h = jnp.dot(x_ref[...], w_ref[...], preferred_element_type=jnp.float32)
    h = h + b_ref[...].astype(jnp.float32)
    ss = ss_ref[...]                          # (tile_m, 2): col 0 scale, col 1 shift
    y = h * ss[:, 0:1] + ss[:, 1:2]
    o_ref[...] = jnp.maximum(y, 0.0).astype(o_ref.dtype)


def mkld_projector_forward(x, w, b, gamma, beta, eps=1e-5, *, use_xla_fallback=True):
    """x: (bs, c, d) -> (bs//25, 25, ecoder_dim2).

    w: (c*d, ecoder_dim2) (transposed vs. torch Linear.weight), b: (ecoder_dim2,),
    gamma/beta: (25,) BatchNorm1d affine parameters.  BN uses batch statistics
    (the module's default training-mode forward).
    """
    bs, c, d = x.shape
    d1 = c * d
    assert bs % 25 == 0, "MKLD_Projector requires batch size divisible by 25"
    assert w.shape[0] == d1, "ecoder_dim1 must equal c*d"
    n_grp = bs // 25
    m_rows = bs
    d2 = w.shape[1]
    itemsize = jnp.dtype(x.dtype).itemsize

    x2d = x.reshape(m_rows, d1)

    # ---- Tiny-shape fallback: fixed pallas_call overhead would dominate. ----
    if use_xla_fallback and (m_rows * max(d1, d2) * itemsize) < (1 << 20):
        h = x2d.astype(jnp.float32) @ w.astype(jnp.float32) + b.astype(jnp.float32)
        hg = h.reshape(n_grp, 25, d2)
        mean = hg.mean(axis=(0, 2), keepdims=True)
        var = hg.var(axis=(0, 2), keepdims=True)
        g = gamma.astype(jnp.float32)[None, :, None]
        bt = beta.astype(jnp.float32)[None, :, None]
        y = (hg - mean) * (g * jax.lax.rsqrt(var + eps)) + bt
        return jnp.maximum(y, 0.0).astype(x.dtype)

    # ---- Generation-aware tiling / VMEM budget. -----------------------------
    cap = _vmem_capacity_bytes()
    budget = int(cap * 0.70)
    tile_m = _choose_tile_m(m_rows, d1, d2, itemsize, budget)
    grid = (pl.cdiv(m_rows, tile_m),)

    d1p = _round_up(d1, 128)
    d2p = _round_up(d2, 128)
    resident = (2 * (_round_up(d1, 8) * d2p + 8 * d2p) * itemsize   # W + bias (double-buffered)
                + 2 * tile_m * 128 * 4)                             # resident scale/shift block
    per_step = tile_m * (2 * d1p * itemsize + 2 * d2p * itemsize + d2p * 4 + 2 * 128 * 4)
    vmem_limit = int(min(resident + per_step + 16 * _MIB, max(32 * _MIB, int(0.9 * cap))))

    w_c = w.astype(x.dtype)                       # caller may pass bf16 x/w on v5e
    b_2d = b.astype(x.dtype).reshape(1, d2)

    mm_flops = 2 * m_rows * d1 * d2

    # ---- Pass 1: stats only (per-row sum / sumsq), no h round trip. ---------
    stats = pl.pallas_call(
        _stats_kernel,
        out_shape=jax.ShapeDtypeStruct((m_rows, 2), jnp.float32),
        grid=grid,
        in_specs=[pl.BlockSpec((tile_m, d1), lambda i: (i, 0)),   # x tile
                  pl.BlockSpec((d1, d2), lambda i: (0, 0)),       # resident W
                  pl.BlockSpec((1, d2), lambda i: (0, 0))],       # resident bias
        out_specs=pl.BlockSpec((tile_m, 2), lambda i: (i, 0)),
        compiler_params=pltpu.CompilerParams(
            dimension_semantics=("parallel",),
            vmem_limit_bytes=vmem_limit),
        cost_estimate=pl.CostEstimate(
            flops=mm_flops + 4 * m_rows * d2,
            transcendentals=0,
            bytes_accessed=(m_rows * d1 + d1 * d2 + d2) * itemsize + m_rows * 2 * 4),
    )(x2d, w_c, b_2d)

    # ---- Tiny 25-channel finalisation (plain JAX; O(bs) scalars). -----------
    cnt = jnp.float32(n_grp * d2)
    ch_sum = stats[:, 0].reshape(n_grp, 25).sum(axis=0)
    ch_sq = stats[:, 1].reshape(n_grp, 25).sum(axis=0)
    mean = ch_sum / cnt
    var = jnp.maximum(ch_sq / cnt - mean * mean, 0.0)   # biased var (torch BN train)
    scale = gamma.astype(jnp.float32) * jax.lax.rsqrt(var + eps)
    shift = beta.astype(jnp.float32) - mean * scale
    # Every block starts at BN channel 0 (tile_m % 25 == 0, or a single block),
    # so one (tile_m, 2) scale/shift block is valid for all grid steps.
    reps = pl.cdiv(tile_m, 25)
    ss_block = jnp.stack([jnp.tile(scale, reps)[:tile_m],
                          jnp.tile(shift, reps)[:tile_m]], axis=1)   # (tile_m, 2) f32

    # ---- Pass 2: fused Linear (recomputed) + BN affine + ReLU -> y. ---------
    y2d = pl.pallas_call(
        _fc_bn_relu_kernel,
        out_shape=jax.ShapeDtypeStruct((m_rows, d2), x.dtype),
        grid=grid,
        in_specs=[pl.BlockSpec((tile_m, d1), lambda i: (i, 0)),   # x tile
                  pl.BlockSpec((d1, d2), lambda i: (0, 0)),       # resident W
                  pl.BlockSpec((1, d2), lambda i: (0, 0)),        # resident bias
                  pl.BlockSpec((tile_m, 2), lambda i: (0, 0))],   # resident scale/shift
        out_specs=pl.BlockSpec((tile_m, d2), lambda i: (i, 0)),
        compiler_params=pltpu.CompilerParams(
            dimension_semantics=("parallel",),
            vmem_limit_bytes=vmem_limit),
        cost_estimate=pl.CostEstimate(
            flops=mm_flops + 4 * m_rows * d2,
            transcendentals=0,
            bytes_accessed=(m_rows * d1 + d1 * d2 + d2 + m_rows * d2) * itemsize
                           + tile_m * 2 * 4),
    )(x2d, w_c, b_2d, ss_block)

    return y2d.reshape(n_grp, 25, d2)


if __name__ == "__main__":
    key = jax.random.PRNGKey(0)
    kx, kw, kb, kg, kbt = jax.random.split(key, 5)

    # Small shapes consistent with the module: bs must be a multiple of 25.
    bs, c, d = 50, 4, 8
    ecoder_dim1 = c * d           # 32
    ecoder_dim2 = 64
    eps = 1e-5

    x = jax.random.normal(kx, (bs, c, d), dtype=jnp.float32)
    lim = 1.0 / (ecoder_dim1 ** 0.5)
    # Stored as (in_features, out_features) -- transposed vs torch Linear.weight.
    w = jax.random.uniform(kw, (ecoder_dim1, ecoder_dim2), jnp.float32, -lim, lim)
    b = jax.random.uniform(kb, (ecoder_dim2,), jnp.float32, -lim, lim)
    gamma = 1.0 + 0.1 * jax.random.normal(kg, (25,), jnp.float32)
    beta = 0.1 * jax.random.normal(kbt, (25,), jnp.float32)

    # Pure-JAX reference: view -> Linear -> training-mode BatchNorm1d(25) -> ReLU.
    x3 = x.reshape(-1, 25, ecoder_dim1)
    h_ref = x3 @ w + b
    mean = h_ref.mean(axis=(0, 2), keepdims=True)
    var = h_ref.var(axis=(0, 2), keepdims=True)
    ref = (h_ref - mean) / jnp.sqrt(var + eps) * gamma[None, :, None] + beta[None, :, None]
    ref = jnp.maximum(ref, 0.0)

    # Pallas path (force past the tiny-shape XLA fallback so the kernels run).
    fwd = jax.jit(functools.partial(mkld_projector_forward, use_xla_fallback=False))
    out = jax.block_until_ready(fwd(x, w, b, gamma, beta, eps))
    assert out.shape == (bs // 25, 25, ecoder_dim2)
    assert jnp.allclose(out, ref, atol=1e-4, rtol=1e-4), \
        float(jnp.max(jnp.abs(out - ref)))

    # Default wrapper behaviour at these tiny sizes (XLA fallback) also matches.
    out_fb = jax.block_until_ready(jax.jit(mkld_projector_forward)(x, w, b, gamma, beta, eps))
    assert jnp.allclose(out_fb, ref, atol=1e-4, rtol=1e-4)

    print("KERNEL_OK")
</pallas_src>

<mosaic_0001>
module attributes {stable_mosaic.version = 11 : i64} {
  func.func @_stats_kernel(%arg0: i32, %arg1: memref<56x32xf32, #tpu.memory_space<vmem>>, %arg2: memref<32x64xf32, #tpu.memory_space<vmem>>, %arg3: memref<1x64xf32, #tpu.memory_space<vmem>>, %arg4: memref<56x2xf32, #tpu.memory_space<vmem>>) attributes {dimension_semantics = [#tpu.dimension_semantics<parallel>], iteration_bounds = array<i64: 1>, scalar_prefetch = 0 : i64, scratch_operands = 0 : i64, tpu.core_type = #tpu.core_type<tc>, window_params = [{transform_indices = @transform_0, window_bounds = array<i64: 56, 32>}, {pipeline_mode = #tpu.pipeline_mode<synchronous>, transform_indices = @transform_1, window_bounds = array<i64: 32, 64>}, {pipeline_mode = #tpu.pipeline_mode<synchronous>, transform_indices = @transform_2, window_bounds = array<i64: 1, 64>}, {transform_indices = @transform_3, window_bounds = array<i64: 56, 2>}]} {
    %c0 = arith.constant 0 : index
    %c0_0 = arith.constant 0 : index
    %0 = vector.load %arg1[%c0, %c0_0] : memref<56x32xf32, #tpu.memory_space<vmem>>, vector<56x32xf32>
    %c0_1 = arith.constant 0 : index
    %c0_2 = arith.constant 0 : index
    %1 = vector.load %arg2[%c0_1, %c0_2] : memref<32x64xf32, #tpu.memory_space<vmem>>, vector<32x64xf32>
    %cst = arith.constant dense<0.000000e+00> : vector<56x64xf32>
    %2 = tpu.matmul %0, %1, %cst {dimension_numbers = #tpu.dot_dimension_numbers<[1], [0], [0], [1], [0, 0, 1, 1], [], []>} : vector<56x32xf32>, vector<32x64xf32>, vector<56x64xf32> -> vector<56x64xf32>
    %c0_3 = arith.constant 0 : index
    %c0_4 = arith.constant 0 : index
    %3 = vector.load %arg3[%c0_3, %c0_4] : memref<1x64xf32, #tpu.memory_space<vmem>>, vector<1x64xf32>
    %4 = vector.broadcast %3 : vector<1x64xf32> to vector<56x64xf32>
    %5 = arith.addf %2, %4 : vector<56x64xf32>
    %cst_5 = arith.constant dense<0.000000e+00> : vector<56xf32>
    %6 = vector.multi_reduction <add>, %5, %cst_5 [1] : vector<56x64xf32> to vector<56xf32>
    %7 = vector.shape_cast %6 : vector<56xf32> to vector<56x1xf32>
    %c0_6 = arith.constant 0 : index
    %c0_7 = arith.constant 0 : index
    %8 = vector.load %arg4[%c0_6, %c0_7] : memref<56x2xf32, #tpu.memory_space<vmem>>, vector<56x1xf32>
    tpu.vector_store %arg4[%c0_6, %c0_7], %7 {strides = array<i32>} : memref<56x2xf32, #tpu.memory_space<vmem>>, vector<56x1xf32>,
    %9 = arith.mulf %5, %5 : vector<56x64xf32>
    %cst_8 = arith.constant dense<0.000000e+00> : vector<56xf32>
    %10 = vector.multi_reduction <add>, %9, %cst_8 [1] : vector<56x64xf32> to vector<56xf32>
    %11 = vector.shape_cast %10 : vector<56xf32> to vector<56x1xf32>
    %c0_9 = arith.constant 0 : index
    %c1 = arith.constant 1 : index
    %12 = vector.load %arg4[%c0_9, %c1] : memref<56x2xf32, #tpu.memory_space<vmem>>, vector<56x1xf32>
    tpu.vector_store %arg4[%c0_9, %c1], %11 {strides = array<i32>} : memref<56x2xf32, #tpu.memory_space<vmem>>, vector<56x1xf32>,
    return
  }
  func.func @transform_0(%arg0: i32) -> (i32, i32) {
    %c0_i32 = arith.constant 0 : i32
    %c0_i32_0 = arith.constant 0 : i32
    return %arg0, %c0_i32 : i32, i32
  }
  func.func @transform_1(%arg0: i32) -> (i32, i32) {
    %c0_i32 = arith.constant 0 : i32
    %c0_i32_0 = arith.constant 0 : i32
    %c0_i32_1 = arith.constant 0 : i32
    return %c0_i32, %c0_i32_0 : i32, i32
  }
  func.func @transform_2(%arg0: i32) -> (i32, i32) {
    %c0_i32 = arith.constant 0 : i32
    %c0_i32_0 = arith.constant 0 : i32
    %c0_i32_1 = arith.constant 0 : i32
    return %c0_i32, %c0_i32_0 : i32, i32
  }
  func.func @transform_3(%arg0: i32) -> (i32, i32) {
    %c0_i32 = arith.constant 0 : i32
    %c0_i32_0 = arith.constant 0 : i32
    return %arg0, %c0_i32 : i32, i32
  }
}

module attributes {stable_mosaic.version = 11 : i64} {
  func.func @_fc_bn_relu_kernel(%arg0: i32, %arg1: memref<56x32xf32, #tpu.memory_space<vmem>>, %arg2: memref<32x64xf32, #tpu.memory_space<vmem>>, %arg3: memref<1x64xf32, #tpu.memory_space<vmem>>, %arg4: memref<56x2xf32, #tpu.memory_space<vmem>>, %arg5: memref<56x64xf32, #tpu.memory_space<vmem>>) attributes {dimension_semantics = [#tpu.dimension_semantics<parallel>], iteration_bounds = array<i64: 1>, scalar_prefetch = 0 : i64, scratch_operands = 0 : i64, tpu.core_type = #tpu.core_type<tc>, window_params = [{transform_indices = @transform_0, window_bounds = array<i64: 56, 32>}, {pipeline_mode = #tpu.pipeline_mode<synchronous>, transform_indices = @transform_1, window_bounds = array<i64: 32, 64>}, {pipeline_mode = #tpu.pipeline_mode<synchronous>, transform_indices = @transform_2, window_bounds = array<i64: 1, 64>}, {pipeline_mode = #tpu.pipeline_mode<synchronous>, transform_indices = @transform_3, window_bounds = array<i64: 56, 2>}, {transform_indices = @transform_4, window_bounds = array<i64: 56, 64>}]} {
    %c0 = arith.constant 0 : index
    %c0_0 = arith.constant 0 : index
    %0 = vector.load %arg1[%c0, %c0_0] : memref<56x32xf32, #tpu.memory_space<vmem>>, vector<56x32xf32>
    %c0_1 = arith.constant 0 : index
    %c0_2 = arith.constant 0 : index
    %1 = vector.load %arg2[%c0_1, %c0_2] : memref<32x64xf32, #tpu.memory_space<vmem>>, vector<32x64xf32>
    %cst = arith.constant dense<0.000000e+00> : vector<56x64xf32>
    %2 = tpu.matmul %0, %1, %cst {dimension_numbers = #tpu.dot_dimension_numbers<[1], [0], [0], [1], [0, 0, 1, 1], [], []>} : vector<56x32xf32>, vector<32x64xf32>, vector<56x64xf32> -> vector<56x64xf32>
    %c0_3 = arith.constant 0 : index
    %c0_4 = arith.constant 0 : index
    %3 = vector.load %arg3[%c0_3, %c0_4] : memref<1x64xf32, #tpu.memory_space<vmem>>, vector<1x64xf32>
    %4 = vector.broadcast %3 : vector<1x64xf32> to vector<56x64xf32>
    %5 = arith.addf %2, %4 : vector<56x64xf32>
    %c0_5 = arith.constant 0 : index
    %c0_6 = arith.constant 0 : index
    %6 = vector.load %arg4[%c0_5, %c0_6] : memref<56x2xf32, #tpu.memory_space<vmem>>, vector<56x2xf32>
    %7 = vector.extract_strided_slice %6 {offsets = [0, 0], sizes = [56, 1], strides = [1, 1]} : vector<56x2xf32> to vector<56x1xf32>
    %8 = vector.broadcast %7 : vector<56x1xf32> to vector<56x64xf32>
    %9 = arith.mulf %5, %8 : vector<56x64xf32>
    %10 = vector.extract_strided_slice %6 {offsets = [0, 1], sizes = [56, 1], strides = [1, 1]} : vector<56x2xf32> to vector<56x1xf32>
    %11 = vector.broadcast %10 : vector<56x1xf32> to vector<56x64xf32>
    %12 = arith.addf %9, %11 : vector<56x64xf32>
    %cst_7 = arith.constant 0.000000e+00 : f32
    %13 = vector.broadcast %cst_7 : f32 to vector<56x64xf32>
    %14 = arith.maximumf %12, %13 : vector<56x64xf32>
    %c0_8 = arith.constant 0 : index
    %c0_9 = arith.constant 0 : index
    %15 = vector.load %arg5[%c0_8, %c0_9] : memref<56x64xf32, #tpu.memory_space<vmem>>, vector<56x64xf32>
    tpu.vector_store %arg5[%c0_8, %c0_9], %14 {strides = array<i32>} : memref<56x64xf32, #tpu.memory_space<vmem>>, vector<56x64xf32>,
    return
  }
  func.func @transform_0(%arg0: i32) -> (i32, i32) {
    %c0_i32 = arith.constant 0 : i32
    %c0_i32_0 = arith.constant 0 : i32
    return %arg0, %c0_i32 : i32, i32
  }
  func.func @transform_1(%arg0: i32) -> (i32, i32) {
    %c0_i32 = arith.constant 0 : i32
    %c0_i32_0 = arith.constant 0 : i32
    %c0_i32_1 = arith.constant 0 : i32
    return %c0_i32, %c0_i32_0 : i32, i32
  }
  func.func @transform_2(%arg0: i32) -> (i32, i32) {
    %c0_i32 = arith.constant 0 : i32
    %c0_i32_0 = arith.constant 0 : i32
    %c0_i32_1 = arith.constant 0 : i32
    return %c0_i32, %c0_i32_0 : i32, i32
  }
  func.func @transform_3(%arg0: i32) -> (i32, i32) {
    %c0_i32 = arith.constant 0 : i32
    %c0_i32_0 = arith.constant 0 : i32
    %c0_i32_1 = arith.constant 0 : i32
    return %c0_i32, %c0_i32_0 : i32, i32
  }
  func.func @transform_4(%arg0: i32) -> (i32, i32) {
    %c0_i32 = arith.constant 0 : i32
    %c0_i32_0 = arith.constant 0 : i32
    return %arg0, %c0_i32 : i32, i32
  }
}

</mosaic_0001>

<llo_original>
// kernel: squeeze.2
$region0: #{squeeze.2}
  %s0 = inlined_call_operand.vmem [shape: f32[50], index: 0, kind: input, shape index: {}]
  %s1 = inlined_call_operand.vmem [shape: f32[2,25], index: 1, kind: output, shape index: {}]
  $region1: #{squeeze.2} parent=0
    #allocation0 [shape = 'u8[4096]{0}', space=vmem, size = 0x1000, scoped, tag = 'scoped mem for output reshape']
    #allocation1 [shape = 'u8[4096]{0}', space=vmem, size = 0x1000, scoped, tag = 'scoped mem for input reshape']
    %s3 = sshllo.u32 0, 1
    %v4 = vld [vmem:[%s0] sm:%s3]
    %5 = vst [vmem:[#allocation1] sm:%s3] %v4
    %v6 = vld [vmem:[#allocation1] sm:$0x1]
    %vm7 = vcmask 203776
    %8 = vst.msk [vmem:[#allocation0] sm:$0x1] %vm7, %v6
    %v9 = vld [vmem:[#allocation1] sm:$0x1]
    %10 = vrot.lane.b32.xlu0 %v9, 103
    %v11 = vpop.permute.xlu0 %10
    %vm12 = vcmask 203776
    %s13 = scalar_lea.vmem [#allocation0], 1
    %14 = vst.msk [vmem:[%s13] sm:$0x1] %vm12, %v11
    %s16 = sshllo.u32 0, 2
    %v18 = vld [vmem:[#allocation0] sm:%s16]
    %s19 = sshllo.u32 0, 2
    %20 = vst [vmem:[%s1] sm:%s19] %v18

// kernel: tile.18
$region0: #{tile.18}
  #allocation0 [shape = 's32[1]{0}', space=sflag, size = 0x4, scoped, tag = 'scoped memory for tile.18']
  %s0 = inlined_call_operand.vmem [shape: f32[25], index: 0, kind: input, shape index: {}]
  %s1 = inlined_call_operand.vmem [shape: f32[3,25], index: 1, kind: output, shape index: {}]
  // Predicated region
  $region2: #{tile.18} parent=0 // pred_check
    _
  $region3: #{tile.18} parent=0 // pred_check_branch
    %3 = sbr.rel (0) target = $region5
  $region4: #{tile.18} parent=0 // pred_region
    _
  $region5: #{tile.18} parent=0 // pred_fallthru
    _
  %v4 = vld [vmem:[%s0] ss:$0 sm:$0xff]
  %5 = vst [vmem:[%s1] sm:$0xf] %v4

// kernel: tile.19
$region0: #{tile.19}
  %s0 = inlined_call_operand.vmem [shape: f32[3,25], index: 0, kind: input, shape index: {}]
  %s1 = inlined_call_operand.vmem [shape: f32[75], index: 1, kind: output, shape index: {}]
  $region1: #{tile.19} parent=0
    #allocation0 [shape = 'u8[4096]{0}', space=vmem, size = 0x1000, scoped, tag = 'scoped mem for output reshape']
    #allocation1 [shape = 'u8[4096]{0}', space=vmem, size = 0x1000, scoped, tag = 'scoped mem for input reshape']
    %s3 = sshllo.u32 0, 4
    %v4 = vld [vmem:[%s0] sm:%s3]
    %5 = vst [vmem:[#allocation1] sm:%s3] %v4
    %v6 = vld [vmem:[#allocation1] sm:$0x1]
    %vm7 = vcmask 203776
    %8 = vst.msk [vmem:[#allocation0] sm:$0x1] %vm7, %v6
    %s9 = scalar_lea.vmem [#allocation1], 2
    %v10 = vld [vmem:[%s9] sm:$0x1]
    %11 = vrot.lane.b32.xlu0 %v10, 50
    %v12 = vpop.permute.xlu0 %11
    %vm13 = vcmask 613776
    %14 = vst.msk [vmem:[#allocation0] sm:$0x1] %vm13, %v12
    %s15 = scalar_lea.vmem [#allocation1], 1
    %v16 = vld [vmem:[%s15] sm:$0x1]
    %17 = vrot.lane.b32.xlu0 %v16, 25
    %v18 = vpop.permute.xlu0 %17
    %vm19 = vcmask 408776
    %20 = vst.msk [vmem:[#allocation0] sm:$0x1] %vm19, %v18
    %s22 = sshllo.u32 0, 1
    %v24 = vld [vmem:[#allocation0] sm:%s22]
    %s25 = sshllo.u32 0, 1
    %26 = vst [vmem:[%s1] sm:%s25] %v24

// kernel: mkld_projector_forward.2
$region0: #{mkld_projector_forward.2}
  #allocation0 [shape = 'u32[]', space=smem, size = 0x4, offset = 0x4, fixed_abs, tag = 'smem constant byte address 0x4 - core index']
  #allocation1 [shape = 'u32[144,128]{1,0:T(1,128)}', space=vmem, size = 0x12000, scoped, tag = 'internal scratch']
  %s0 = inlined_call_operand.vmem [shape: f32[50,32], index: 0, kind: input, shape index: {}]
  %s1 = inlined_call_operand.vmem [shape: f32[32,64], index: 1, kind: input, shape index: {}]
  %s2 = inlined_call_operand.vmem [shape: f32[1,64], index: 2, kind: input, shape index: {}]
  %s3 = inlined_call_operand.vmem [shape: f32[50,2], index: 3, kind: output, shape index: {}]
  %s4 = sld [smem:[#allocation0]]
  $region22: #{mkld_projector_forward.2} parent=0
    _
  %s6 = ssub.s32 1, %s4
  %s7 = scalar_select 0, %s6, %s4
  // Predicated region
  $region2: #{mkld_projector_forward.2} parent=0 // pred_check
    _
  $region3: #{mkld_projector_forward.2} parent=0 // pred_check_branch
    %9 = sbr.rel (0) target = $region5
  $region4: #{mkld_projector_forward.2} parent=0 // pred_region
    _
  $region5: #{mkld_projector_forward.2} parent=0 // pred_fallthru
    _
  // Predicated region
  $region6: #{mkld_projector_forward.2} parent=0 // pred_check
    _
  $region7: #{mkld_projector_forward.2} parent=0 // pred_check_branch
    %11 = sbr.rel (0) target = $region9
  $region8: #{mkld_projector_forward.2} parent=0 // pred_region
    _
  $region9: #{mkld_projector_forward.2} parent=0 // pred_fallthru
    _
  // Predicated region
  $region10: #{mkld_projector_forward.2} parent=0 // pred_check
    _
  $region11: #{mkld_projector_forward.2} parent=0 // pred_check_branch
    %13 = sbr.rel (0) target = $region13
  $region12: #{mkld_projector_forward.2} parent=0 // pred_region
    _
  $region13: #{mkld_projector_forward.2} parent=0 // pred_fallthru
    _
  %v14 = vld [vmem:[%s0] sm:$0xff]
  %v15 = vld [vmem:[%s0 + $0x8] sm:$0xff]
  %v16 = vld [vmem:[%s0 + $0x10] sm:$0xff]
  %v17 = vld [vmem:[%s0 + $0x18] sm:$0xff]
  %v18 = vld [vmem:[%s0 + $0x20] sm:$0xff]
  %v19 = vld [vmem:[%s0 + $0x28] sm:$0xff]
  %v20 = vld [vmem:[%s0 + $0x30] sm:$0xff]
  %v21 = vld [vmem:[%s1] sm:$0xff]
  %v22 = vld [vmem:[%s1 + $0x8] sm:$0xff]
  %v23 = vld [vmem:[%s1 + $0x10] sm:$0xff]
  %v24 = vld [vmem:[%s1 + $0x18] sm:$0xff]
  %v25 = vld [vmem:[%s2] sm:$0x1]
  %v27 = vlaneseq
  %v28 = vshrl.u32 %v27, 7
  %v29 = vsub.s32 0, %v28
  %v30 = vrot.slane %v25, %v29
  %vm32 = vcmask 261120
  %v34 = vsel %vm32, %v14, 0
  %v37 = vsel %vm32, %v15, 0
  %v40 = vsel %vm32, %v16, 0
  %v43 = vsel %vm32, %v17, 0
  %v46 = vsel %vm32, %v18, 0
  %v49 = vsel %vm32, %v19, 0
  %v52 = vsel %vm32, %v20, 0
  %54 = vmatprep.subr.mxu0 0.0
  %55 = vmatpush1.msra.mxu0 %v21
  %56 = vmatprep.subr.mxu0 0.0
  %57 = vmatpush1.msra.mxu0 %v22
  %58 = vmatprep.subr.mxu0 0.0
  %59 = vmatpush1.msra.mxu0 %v23
  %60 = vmatprep.subr.mxu0 0.0
  %61 = vmatpush1.msra.mxu0 %v24
  %62 = vmatprep.subr.mxu0 0.0
  %63 = vmatpush1.msra.mxu0 0.0
  %64 = vmatprep.subr.mxu0 0.0
  %65 = vmatpush1.msra.mxu0 0.0
  %66 = vmatprep.subr.mxu0 0.0
  %67 = vmatpush1.msra.mxu0 0.0
  %68 = vmatprep.subr.mxu0 0.0
  %69 = vmatpush1.msra.mxu0 0.0
  %70 = vmatprep.subr.mxu0 0.0
  %71 = vmatpush1.msra.mxu0 0.0
  %72 = vmatprep.subr.mxu0 0.0
  %73 = vmatpush1.msra.mxu0 0.0
  %74 = vmatprep.subr.mxu0 0.0
  %75 = vmatpush1.msra.mxu0 0.0
  %76 = vmatprep.subr.mxu0 0.0
  %77 = vmatpush1.msra.mxu0 0.0
  %78 = vmatprep.subr.mxu0 0.0
  %79 = vmatpush1.msra.mxu0 0.0
  %80 = vmatprep.subr.mxu0 0.0
  %81 = vmatpush1.msra.mxu0 0.0
  %82 = vmatprep.subr.mxu0 0.0
  %83 = vmatpush1.msra.mxu0 0.0
  %84 = vmatprep.subr.mxu0 0.0
  %85 = vmatpush1.msra.mxu0 0.0
  %86 = vmatprep.subr.mxu0 0.0
  %87 = vmatpush1.msra.mxu0 0.0
  %88 = vmatprep.subr.mxu0 0.0
  %89 = vmatpush1.msra.mxu0 0.0
  %90 = vmatprep.subr.mxu0 0.0
  %91 = vmatpush1.msra.mxu0 0.0
  %92 = vmatprep.subr.mxu0 0.0
  %93 = vmatpush1.msra.mxu0 0.0
  %94 = vmatprep.subr.mxu0 0.0
  %95 = vmatpush1.msra.mxu0 0.0
  %96 = vmatprep.subr.mxu0 0.0
  %97 = vmatpush1.msra.mxu0 0.0
  %98 = vmatprep.subr.mxu0 0.0
  %99 = vmatpush1.msra.mxu0 0.0
  %100 = vmatprep.subr.mxu0 0.0
  %101 = vmatpush1.msra.mxu0 0.0
  %102 = vmatprep.subr.mxu0 0.0
  %103 = vmatpush1.msra.mxu0 0.0
  %104 = vmatprep.subr.mxu0 0.0
  %105 = vmatpush1.msra.mxu0 0.0
  %106 = vmatprep.subr.mxu0 0.0
  %107 = vmatpush1.msra.mxu0 0.0
  %108 = vmatprep.subr.mxu0 0.0
  %109 = vmatpush1.msra.mxu0 0.0
  %110 = vmatprep.subr.mxu0 0.0
  %111 = vmatpush1.msra.mxu0 0.0
  %112 = vmatprep.subr.mxu0 0.0
  %113 = vmatpush1.msra.mxu0 0.0
  %114 = vmatprep.subr.mxu0 0.0
  %115 = vmatpush1.msra.mxu0 0.0
  %116 = vmatprep.subr.mxu0 0.0
  %117 = vmatpush1.msra.mxu0 0.0
  %118 = vmatprep.mubr.f32.mxu0 0.0
  %119 = vmatmul.mubr.f32.gmra.mrb[0].mxu0 %v34
  %v120 = vpop.f32.mrb[0].mxu0
  %v121 = vadd.f32 %v30, %v120
  %v122 = vpop.f32.mrb[0].mxu0
  %123 = vmatprep.mubr.f32.mxu0 0.0
  %124 = vmatmul.mubr.f32.gmra.mrb[0].mxu0 %v37
  %v125 = vpop.f32.mrb[0].mxu0
  %v126 = vadd.f32 %v30, %v125
  %v127 = vpop.f32.mrb[0].mxu0
  %128 = vmatprep.mubr.f32.mxu0 0.0
  %129 = vmatmul.mubr.f32.gmra.mrb[0].mxu0 %v40
  %v130 = vpop.f32.mrb[0].mxu0
  %v131 = vadd.f32 %v30, %v130
  %v132 = vpop.f32.mrb[0].mxu0
  %133 = vmatprep.mubr.f32.mxu0 0.0
  %134 = vmatmul.mubr.f32.gmra.mrb[0].mxu0 %v43
  %v135 = vpop.f32.mrb[0].mxu0
  %v136 = vadd.f32 %v30, %v135
  %v137 = vpop.f32.mrb[0].mxu0
  %138 = vmatprep.mubr.f32.mxu0 0.0
  %139 = vmatmul.mubr.f32.gmra.mrb[0].mxu0 %v46
  %v140 = vpop.f32.mrb[0].mxu0
  %v141 = vadd.f32 %v30, %v140
  %v142 = vpop.f32.mrb[0].mxu0
  %143 = vmatprep.mubr.f32.mxu0 0.0
  %144 = vmatmul.mubr.f32.gmra.mrb[0].mxu0 %v49
  %v145 = vpop.f32.mrb[0].mxu0
  %v146 = vadd.f32 %v30, %v145
  %v147 = vpop.f32.mrb[0].mxu0
  %148 = vmatprep.mubr.f32.mxu0 0.0
  %149 = vmatmul.mubr.f32.gmra.mrb[0].mxu0 %v52
  %v150 = vpop.f32.mrb[0].mxu0
  %v151 = vadd.f32 %v30, %v150
  %v152 = vpop.f32.mrb[0].mxu0
  %153 = vdwg.mxu0
  %vm154 = vcmask 523264
  %v155 = vsel %vm154, %v121, 0.0
  %156 = vadd.xlane.f32.xlu0 %v155
  %v157 = vpop.xlane.xlu0 %156
  %v158 = vsel %vm154, %v126, 0.0
  %159 = vadd.xlane.f32.xlu0 %v158
  %v160 = vpop.xlane.xlu0 %159
  %v161 = vsel %vm154, %v131, 0.0
  %162 = vadd.xlane.f32.xlu0 %v161
  %v163 = vpop.xlane.xlu0 %162
  %v164 = vsel %vm154, %v136, 0.0
  %165 = vadd.xlane.f32.xlu0 %v164
  %v166 = vpop.xlane.xlu0 %165
  %v167 = vsel %vm154, %v141, 0.0
  %168 = vadd.xlane.f32.xlu0 %v167
  %v169 = vpop.xlane.xlu0 %168
  %v170 = vsel %vm154, %v146, 0.0
  %171 = vadd.xlane.f32.xlu0 %v170
  %v172 = vpop.xlane.xlu0 %171
  %v173 = vsel %vm154, %v151, 0.0
  %174 = vadd.xlane.f32.xlu0 %v173
  %v175 = vpop.xlane.xlu0 %174
  %vm176 = vcmask 7168
  %177 = vst.msk [vmem:[%s3] sm:$0xff] %vm176, %v157
  %178 = vst.msk [vmem:[%s3 + $0x8] sm:$0xff] %vm176, %v160
  %179 = vst.msk [vmem:[%s3 + $0x10] sm:$0xff] %vm176, %v163
  %180 = vst.msk [vmem:[%s3 + $0x18] sm:$0xff] %vm176, %v166
  %181 = vst.msk [vmem:[%s3 + $0x20] sm:$0xff] %vm176, %v169
  %182 = vst.msk [vmem:[%s3 + $0x28] sm:$0xff] %vm176, %v172
  %183 = vst.msk [vmem:[%s3 + $0x30] sm:$0xff] %vm176, %v175
  %v184 = vmul.f32 %v121, %v121
  %v185 = vmul.f32 %v126, %v126
  %v186 = vmul.f32 %v131, %v131
  %v187 = vmul.f32 %v136, %v136
  %v188 = vmul.f32 %v141, %v141
  %v189 = vmul.f32 %v146, %v146
  %v190 = vmul.f32 %v151, %v151
  %v191 = vsel %vm154, %v184, 0.0
  %192 = vadd.xlane.f32.xlu0 %v191
  %v193 = vpop.xlane.xlu0 %192
  %v194 = vsel %vm154, %v185, 0.0
  %195 = vadd.xlane.f32.xlu0 %v194
  %v196 = vpop.xlane.xlu0 %195
  %v197 = vsel %vm154, %v186, 0.0
  %198 = vadd.xlane.f32.xlu0 %v197
  %v199 = vpop.xlane.xlu0 %198
  %v200 = vsel %vm154, %v187, 0.0
  %201 = vadd.xlane.f32.xlu0 %v200
  %v202 = vpop.xlane.xlu0 %201
  %v203 = vsel %vm154, %v188, 0.0
  %204 = vadd.xlane.f32.xlu0 %v203
  %v205 = vpop.xlane.xlu0 %204
  %v206 = vsel %vm154, %v189, 0.0
  %207 = vadd.xlane.f32.xlu0 %v206
  %v208 = vpop.xlane.xlu0 %207
  %v209 = vsel %vm154, %v190, 0.0
  %210 = vadd.xlane.f32.xlu0 %v209
  %v211 = vpop.xlane.xlu0 %210
  %vm212 = vcmask 15368
  %213 = vst.msk [vmem:[%s3] sm:$0xff] %vm212, %v193
  %214 = vst.msk [vmem:[%s3 + $0x8] sm:$0xff] %vm212, %v196
  %215 = vst.msk [vmem:[%s3 + $0x10] sm:$0xff] %vm212, %v199
  %216 = vst.msk [vmem:[%s3 + $0x18] sm:$0xff] %vm212, %v202
  %217 = vst.msk [vmem:[%s3 + $0x20] sm:$0xff] %vm212, %v205
  %218 = vst.msk [vmem:[%s3 + $0x28] sm:$0xff] %vm212, %v208
  %219 = vst.msk [vmem:[%s3 + $0x30] sm:$0xff] %vm212, %v211
  // Predicated region
  $region14: #{mkld_projector_forward.2} parent=0 // pred_check
    _
  $region15: #{mkld_projector_forward.2} parent=0 // pred_check_branch
    %221 = sbr.rel (0) target = $region17
  $region16: #{mkld_projector_forward.2} parent=0 // pred_region
    _
  $region17: #{mkld_projector_forward.2} parent=0 // pred_fallthru
    _
  // Predicated region
  $region18: #{mkld_projector_forward.2} parent=0 // pred_check
    _
  $region19: #{mkld_projector_forward.2} parent=0 // pred_check_branch
    %223 = sbr.rel (0) target = $region21
  $region20: #{mkld_projector_forward.2} parent=0 // pred_region
    _
  $region21: #{mkld_projector_forward.2} parent=0 // pred_fallthru
    _

// kernel: mkld_projector_forward.3
$region0: #{mkld_projector_forward.3}
  #allocation0 [shape = 'u32[]', space=smem, size = 0x4, offset = 0x4, fixed_abs, tag = 'smem constant byte address 0x4 - core index']
  #allocation1 [shape = 'u32[144,128]{1,0:T(1,128)}', space=vmem, size = 0x12000, scoped, tag = 'internal scratch']
  %s0 = inlined_call_operand.vmem [shape: f32[50,32], index: 0, kind: input, shape index: {}]
  %s1 = inlined_call_operand.vmem [shape: f32[32,64], index: 1, kind: input, shape index: {}]
  %s2 = inlined_call_operand.vmem [shape: f32[1,64], index: 2, kind: input, shape index: {}]
  %s3 = inlined_call_operand.vmem [shape: f32[56,2], index: 3, kind: input, shape index: {}]
  %s4 = inlined_call_operand.vmem [shape: f32[50,64], index: 4, kind: output, shape index: {}]
  %s5 = sld [smem:[#allocation0]]
  $region26: #{mkld_projector_forward.3} parent=0
    _
  %s7 = ssub.s32 1, %s5
  %s8 = scalar_select 0, %s7, %s5
  // Predicated region
  $region2: #{mkld_projector_forward.3} parent=0 // pred_check
    _
  $region3: #{mkld_projector_forward.3} parent=0 // pred_check_branch
    %10 = sbr.rel (0) target = $region5
  $region4: #{mkld_projector_forward.3} parent=0 // pred_region
    _
  $region5: #{mkld_projector_forward.3} parent=0 // pred_fallthru
    _
  // Predicated region
  $region6: #{mkld_projector_forward.3} parent=0 // pred_check
    _
  $region7: #{mkld_projector_forward.3} parent=0 // pred_check_branch
    %12 = sbr.rel (0) target = $region9
  $region8: #{mkld_projector_forward.3} parent=0 // pred_region
    _
  $region9: #{mkld_projector_forward.3} parent=0 // pred_fallthru
    _
  // Predicated region
  $region10: #{mkld_projector_forward.3} parent=0 // pred_check
    _
  $region11: #{mkld_projector_forward.3} parent=0 // pred_check_branch
    %14 = sbr.rel (0) target = $region13
  $region12: #{mkld_projector_forward.3} parent=0 // pred_region
    _
  $region13: #{mkld_projector_forward.3} parent=0 // pred_fallthru
    _
  // Predicated region
  $region14: #{mkld_projector_forward.3} parent=0 // pred_check
    _
  $region15: #{mkld_projector_forward.3} parent=0 // pred_check_branch
    %16 = sbr.rel (0) target = $region17
  $region16: #{mkld_projector_forward.3} parent=0 // pred_region
    _
  $region17: #{mkld_projector_forward.3} parent=0 // pred_fallthru
    _
  %v17 = vld [vmem:[%s0] sm:$0xff]
  %v18 = vld [vmem:[%s0 + $0x8] sm:$0xff]
  %v19 = vld [vmem:[%s0 + $0x10] sm:$0xff]
  %v20 = vld [vmem:[%s0 + $0x18] sm:$0xff]
  %v21 = vld [vmem:[%s0 + $0x20] sm:$0xff]
  %v22 = vld [vmem:[%s0 + $0x28] sm:$0xff]
  %v23 = vld [vmem:[%s0 + $0x30] sm:$0xff]
  %v24 = vld [vmem:[%s1] sm:$0xff]
  %v25 = vld [vmem:[%s1 + $0x8] sm:$0xff]
  %v26 = vld [vmem:[%s1 + $0x10] sm:$0xff]
  %v27 = vld [vmem:[%s1 + $0x18] sm:$0xff]
  %v28 = vld [vmem:[%s2] sm:$0x1]
  %v30 = vlaneseq
  %v31 = vshrl.u32 %v30, 7
  %v32 = vsub.s32 0, %v31
  %v33 = vrot.slane %v28, %v32
  %vm35 = vcmask 261120
  %v37 = vsel %vm35, %v17, 0
  %v40 = vsel %vm35, %v18, 0
  %v43 = vsel %vm35, %v19, 0
  %v46 = vsel %vm35, %v20, 0
  %v49 = vsel %vm35, %v21, 0
  %v52 = vsel %vm35, %v22, 0
  %v55 = vsel %vm35, %v23, 0
  %57 = vmatprep.subr.mxu0 0.0
  %58 = vmatpush1.msra.mxu0 %v24
  %59 = vmatprep.subr.mxu0 0.0
  %60 = vmatpush1.msra.mxu0 %v25
  %61 = vmatprep.subr.mxu0 0.0
  %62 = vmatpush1.msra.mxu0 %v26
  %63 = vmatprep.subr.mxu0 0.0
  %64 = vmatpush1.msra.mxu0 %v27
  %65 = vmatprep.subr.mxu0 0.0
  %66 = vmatpush1.msra.mxu0 0.0
  %67 = vmatprep.subr.mxu0 0.0
  %68 = vmatpush1.msra.mxu0 0.0
  %69 = vmatprep.subr.mxu0 0.0
  %70 = vmatpush1.msra.mxu0 0.0
  %71 = vmatprep.subr.mxu0 0.0
  %72 = vmatpush1.msra.mxu0 0.0
  %73 = vmatprep.subr.mxu0 0.0
  %74 = vmatpush1.msra.mxu0 0.0
  %75 = vmatprep.subr.mxu0 0.0
  %76 = vmatpush1.msra.mxu0 0.0
  %77 = vmatprep.subr.mxu0 0.0
  %78 = vmatpush1.msra.mxu0 0.0
  %79 = vmatprep.subr.mxu0 0.0
  %80 = vmatpush1.msra.mxu0 0.0
  %81 = vmatprep.subr.mxu0 0.0
  %82 = vmatpush1.msra.mxu0 0.0
  %83 = vmatprep.subr.mxu0 0.0
  %84 = vmatpush1.msra.mxu0 0.0
  %85 = vmatprep.subr.mxu0 0.0
  %86 = vmatpush1.msra.mxu0 0.0
  %87 = vmatprep.subr.mxu0 0.0
  %88 = vmatpush1.msra.mxu0 0.0
  %89 = vmatprep.subr.mxu0 0.0
  %90 = vmatpush1.msra.mxu0 0.0
  %91 = vmatprep.subr.mxu0 0.0
  %92 = vmatpush1.msra.mxu0 0.0
  %93 = vmatprep.subr.mxu0 0.0
  %94 = vmatpush1.msra.mxu0 0.0
  %95 = vmatprep.subr.mxu0 0.0
  %96 = vmatpush1.msra.mxu0 0.0
  %97 = vmatprep.subr.mxu0 0.0
  %98 = vmatpush1.msra.mxu0 0.0
  %99 = vmatprep.subr.mxu0 0.0
  %100 = vmatpush1.msra.mxu0 0.0
  %101 = vmatprep.subr.mxu0 0.0
  %102 = vmatpush1.msra.mxu0 0.0
  %103 = vmatprep.subr.mxu0 0.0
  %104 = vmatpush1.msra.mxu0 0.0
  %105 = vmatprep.subr.mxu0 0.0
  %106 = vmatpush1.msra.mxu0 0.0
  %107 = vmatprep.subr.mxu0 0.0
  %108 = vmatpush1.msra.mxu0 0.0
  %109 = vmatprep.subr.mxu0 0.0
  %110 = vmatpush1.msra.mxu0 0.0
  %111 = vmatprep.subr.mxu0 0.0
  %112 = vmatpush1.msra.mxu0 0.0
  %113 = vmatprep.subr.mxu0 0.0
  %114 = vmatpush1.msra.mxu0 0.0
  %115 = vmatprep.subr.mxu0 0.0
  %116 = vmatpush1.msra.mxu0 0.0
  %117 = vmatprep.subr.mxu0 0.0
  %118 = vmatpush1.msra.mxu0 0.0
  %119 = vmatprep.subr.mxu0 0.0
  %120 = vmatpush1.msra.mxu0 0.0
  %121 = vmatprep.mubr.f32.mxu0 0.0
  %122 = vmatmul.mubr.f32.gmra.mrb[0].mxu0 %v37
  %v123 = vpop.f32.mrb[0].mxu0
  %v124 = vadd.f32 %v33, %v123
  %v125 = vpop.f32.mrb[0].mxu0
  %126 = vmatprep.mubr.f32.mxu0 0.0
  %127 = vmatmul.mubr.f32.gmra.mrb[0].mxu0 %v40
  %v128 = vpop.f32.mrb[0].mxu0
  %v129 = vadd.f32 %v33, %v128
  %v130 = vpop.f32.mrb[0].mxu0
  %131 = vmatprep.mubr.f32.mxu0 0.0
  %132 = vmatmul.mubr.f32.gmra.mrb[0].mxu0 %v43
  %v133 = vpop.f32.mrb[0].mxu0
  %v134 = vadd.f32 %v33, %v133
  %v135 = vpop.f32.mrb[0].mxu0
  %136 = vmatprep.mubr.f32.mxu0 0.0
  %137 = vmatmul.mubr.f32.gmra.mrb[0].mxu0 %v46
  %v138 = vpop.f32.mrb[0].mxu0
  %v139 = vadd.f32 %v33, %v138
  %v140 = vpop.f32.mrb[0].mxu0
  %141 = vmatprep.mubr.f32.mxu0 0.0
  %142 = vmatmul.mubr.f32.gmra.mrb[0].mxu0 %v49
  %v143 = vpop.f32.mrb[0].mxu0
  %v144 = vadd.f32 %v33, %v143
  %v145 = vpop.f32.mrb[0].mxu0
  %146 = vmatprep.mubr.f32.mxu0 0.0
  %147 = vmatmul.mubr.f32.gmra.mrb[0].mxu0 %v52
  %v148 = vpop.f32.mrb[0].mxu0
  %v149 = vadd.f32 %v33, %v148
  %v150 = vpop.f32.mrb[0].mxu0
  %151 = vmatprep.mubr.f32.mxu0 0.0
  %152 = vmatmul.mubr.f32.gmra.mrb[0].mxu0 %v55
  %v153 = vpop.f32.mrb[0].mxu0
  %v154 = vadd.f32 %v33, %v153
  %v155 = vpop.f32.mrb[0].mxu0
  %156 = vdwg.mxu0
  %v157 = vld [vmem:[%s3] sm:$0xff]
  %v158 = vld [vmem:[%s3 + $0x8] sm:$0xff]
  %v159 = vld [vmem:[%s3 + $0x10] sm:$0xff]
  %v160 = vld [vmem:[%s3 + $0x18] sm:$0xff]
  %v161 = vld [vmem:[%s3 + $0x20] sm:$0xff]
  %v162 = vld [vmem:[%s3 + $0x28] sm:$0xff]
  %v163 = vld [vmem:[%s3 + $0x30] sm:$0xff]
  %165 = vset.pattern.permute.xlu0 0
  %166 = vperm.xlu0 %165, %v157
  %v167 = vpop.permute.xlu0 %166
  %170 = vset.pattern.permute.xlu0 0
  %171 = vperm.xlu0 %170, %v158
  %v172 = vpop.permute.xlu0 %171
  %175 = vset.pattern.permute.xlu0 0
  %176 = vperm.xlu0 %175, %v159
  %v177 = vpop.permute.xlu0 %176
  %180 = vset.pattern.permute.xlu0 0
  %181 = vperm.xlu0 %180, %v160
  %v182 = vpop.permute.xlu0 %181
  %185 = vset.pattern.permute.xlu0 0
  %186 = vperm.xlu0 %185, %v161
  %v187 = vpop.permute.xlu0 %186
  %190 = vset.pattern.permute.xlu0 0
  %191 = vperm.xlu0 %190, %v162
  %v192 = vpop.permute.xlu0 %191
  %195 = vset.pattern.permute.xlu0 0
  %196 = vperm.xlu0 %195, %v163
  %v197 = vpop.permute.xlu0 %196
  %v199 = vmul.f32 %v124, %v167
  %v200 = vmul.f32 %v129, %v172
  %v201 = vmul.f32 %v134, %v177
  %v202 = vmul.f32 %v139, %v182
  %v203 = vmul.f32 %v144, %v187
  %v204 = vmul.f32 %v149, %v192
  %v205 = vmul.f32 %v154, %v197
  %206 = vset.pattern.permute.xlu0 1
  %207 = vperm.xlu0 %206, %v157
  %v208 = vpop.permute.xlu0 %207
  %210 = vset.pattern.permute.xlu0 1
  %211 = vperm.xlu0 %210, %v158
  %v212 = vpop.permute.xlu0 %211
  %214 = vset.pattern.permute.xlu0 1
  %215 = vperm.xlu0 %214, %v159
  %v216 = vpop.permute.xlu0 %215
  %218 = vset.pattern.permute.xlu0 1
  %219 = vperm.xlu0 %218, %v160
  %v220 = vpop.permute.xlu0 %219
  %222 = vset.pattern.permute.xlu0 1
  %223 = vperm.xlu0 %222, %v161
  %v224 = vpop.permute.xlu0 %223
  %226 = vset.pattern.permute.xlu0 1
  %227 = vperm.xlu0 %226, %v162
  %v228 = vpop.permute.xlu0 %227
  %230 = vset.pattern.permute.xlu0 1
  %231 = vperm.xlu0 %230, %v163
  %v232 = vpop.permute.xlu0 %231
  %v234 = vadd.f32 %v199, %v208
  %v235 = vadd.f32 %v200, %v212
  %v236 = vadd.f32 %v201, %v216
  %v237 = vadd.f32 %v202, %v220
  %v238 = vadd.f32 %v203, %v224
  %v239 = vadd.f32 %v204, %v228
  %v240 = vadd.f32 %v205, %v232
  %v241 = vmax.f32 %v234, 0.0
  %v242 = vmax.f32 %v235, 0.0
  %v243 = vmax.f32 %v236, 0.0
  %v244 = vmax.f32 %v237, 0.0
  %v245 = vmax.f32 %v238, 0.0
  %v246 = vmax.f32 %v239, 0.0
  %v247 = vmax.f32 %v240, 0.0
  %vm248 = vcmask 523264
  %249 = vst.msk [vmem:[%s4] sm:$0xff] %vm248, %v241
  %250 = vst.msk [vmem:[%s4 + $0x8] sm:$0xff] %vm248, %v242
  %251 = vst.msk [vmem:[%s4 + $0x10] sm:$0xff] %vm248, %v243
  %252 = vst.msk [vmem:[%s4 + $0x18] sm:$0xff] %vm248, %v244
  %253 = vst.msk [vmem:[%s4 + $0x20] sm:$0xff] %vm248, %v245
  %254 = vst.msk [vmem:[%s4 + $0x28] sm:$0xff] %vm248, %v246
  %255 = vst.msk [vmem:[%s4 + $0x30] sm:$0xff] %vm248, %v247
  // Predicated region
  $region18: #{mkld_projector_forward.3} parent=0 // pred_check
    _
  $region19: #{mkld_projector_forward.3} parent=0 // pred_check_branch
    %257 = sbr.rel (0) target = $region21
  $region20: #{mkld_projector_forward.3} parent=0 // pred_region
    _
  $region21: #{mkld_projector_forward.3} parent=0 // pred_fallthru
    _
  // Predicated region
  $region22: #{mkld_projector_forward.3} parent=0 // pred_check
    _
  $region23: #{mkld_projector_forward.3} parent=0 // pred_check_branch
    %259 = sbr.rel (0) target = $region25
  $region24: #{mkld_projector_forward.3} parent=0 // pred_region
    _
  $region25: #{mkld_projector_forward.3} parent=0 // pred_fallthru
    _

</llo_original>
